<compile_context>
chip_gen: v7x
topology: tpu7x:2x2x1
jax: 0.10.0
libtpu: 0.0.40
codegen_flags: <defaults>
</compile_context>

<pallas_src>
import functools

import jax
import jax.numpy as jnp
from jax.experimental import pallas as pl
from jax.experimental.pallas import tpu as pltpu

# Hidden layer widths of the FeedforwardNN module.
_H1, _H2, _H3, _H4 = 64, 32, 16, 1


def _mlp_kernel(x_ref, w1t_ref, b1_ref, w2t_ref, b2_ref, w3t_ref, b3_ref,
                w4t_ref, b4_ref, o_ref):
    # Feature-major (lane-dense): activations are (features, TM) so the batch
    # tile occupies the 128-wide lane dimension of every vreg.
    x = x_ref[...]                                            # (TM, D)
    # Layer 1: (64, D) contracted with (TM, D) over D -> (64, TM).
    h = jax.lax.dot_general(
        w1t_ref[...], x,
        dimension_numbers=(((1,), (1,)), ((), ())),
        preferred_element_type=jnp.float32)
    h = jnp.maximum(h + b1_ref[...], 0.0)                     # b1: (64, 1)
    # Layer 2: (32, 64) @ (64, TM) -> (32, TM)
    h = jnp.dot(w2t_ref[...], h, preferred_element_type=jnp.float32)
    h = jnp.maximum(h + b2_ref[...], 0.0)
    # Layer 3: (16, 32) @ (32, TM) -> (16, TM)
    h = jnp.dot(w3t_ref[...], h, preferred_element_type=jnp.float32)
    h = jnp.maximum(h + b3_ref[...], 0.0)
    # Layer 4: (1, 16) @ (16, TM) -> (1, TM) — already lane-dense for store.
    out = jnp.dot(w4t_ref[...], h, preferred_element_type=jnp.float32)
    o_ref[...] = (out + b4_ref[...]).astype(o_ref.dtype)


def _round_up(x, m):
    return ((x + m - 1) // m) * m


def _padded_tile_bytes(rows, cols, elt_bytes):
    """VMEM footprint of a (rows, cols) tile with (8,128) layout padding."""
    sublane = 8 * (4 // elt_bytes)       # f32 -> 8, bf16 -> 16
    return _round_up(max(rows, 1), sublane) * _round_up(max(cols, 1), 128) * elt_bytes


@functools.partial(jax.jit, static_argnames=("tm", "use_bf16"))
def feedforward_nn(x, params, *, tm=None, use_bf16=False):
    """Fused 4-layer MLP forward pass.

    x: (B, input_dim) float32
    params: dict with w1..w4 stored as (in, out) and b1..b4 as (1, out)
    tm: batch-tile rows (None -> auto, sized by bytes)
    use_bf16: cast x / w1 to bf16 (f32 accumulation; slightly looser numerics)
    """
    B, D = x.shape
    w1, b1 = params["w1"], params["b1"]
    w2, b2 = params["w2"], params["b2"]
    w3, b3 = params["w3"], params["b3"]
    w4, b4 = params["w4"], params["b4"]

    # Pre-transpose the (tiny) weights/biases so the kernel runs feature-major.
    w1t, w2t, w3t, w4t = w1.T, w2.T, w3.T, w4.T          # (64,D)(32,64)(16,32)(1,16)
    b1t, b2t, b3t, b4t = b1.T, b2.T, b3.T, b4.T          # (64,1)(32,1)(16,1)(1,1)

    x_in = x
    if use_bf16:
        # x is >95% of the HBM bytes; bf16 halves the streamed traffic.
        x_in = x.astype(jnp.bfloat16)
        w1t = w1t.astype(jnp.bfloat16)
    x_elt = 2 if use_bf16 else 4

    # ---- Generation-aware VMEM budget -----------------------------------
    try:
        vmem_cap = int(pltpu.get_tpu_info().vmem_capacity_bytes)
    except Exception:
        vmem_cap = 64 << 20                     # v7x per-TC VMEM (most conservative)
    budget = int(vmem_cap * 0.55)

    def vmem_estimate(t):
        x_buf = 2 * _padded_tile_bytes(t, D, x_elt)              # double-buffered x
        out_buf = 2 * _padded_tile_bytes(1, t, 4)                # double-buffered out row
        w_bytes = 2 * (_padded_tile_bytes(_H1, D, x_elt) + _padded_tile_bytes(_H1, 1, 4)
                       + _padded_tile_bytes(_H2, _H1, 4) + _padded_tile_bytes(_H2, 1, 4)
                       + _padded_tile_bytes(_H3, _H2, 4) + _padded_tile_bytes(_H3, 1, 4)
                       + _padded_tile_bytes(_H4, _H3, 4) + _padded_tile_bytes(_H4, 1, 4))
        acts = (_padded_tile_bytes(_H1, t, 4) + _padded_tile_bytes(_H2, t, 4)
                + _padded_tile_bytes(_H3, t, 4) + _padded_tile_bytes(_H4, t, 4))
        return x_buf + out_buf + w_bytes + acts

    # ---- Tile sizing: by bytes, multiple of 128 (lanes), VMEM-capped ----
    if tm is None:
        tm_req = max(512, (2 << 20) // (x_elt * D))   # ~2 MiB streamed x block
    else:
        tm_req = int(tm)
    tm_eff = _round_up(max(tm_req, 128), 128)
    tm_eff = min(tm_eff, _round_up(B, 128))           # never (much) larger than batch
    if B >= 256:
        # Guarantee >= 2 grid steps so v7x's two TensorCores both get work.
        tm_eff = min(tm_eff, _round_up(pl.cdiv(B, 2), 128))
    tm_eff = max(tm_eff, 128)
    while tm_eff > 128 and vmem_estimate(tm_eff) > budget:
        tm_eff = max(128, _round_up(tm_eff // 2, 128))

    est = vmem_estimate(tm_eff)
    vmem_limit = int(min(vmem_cap - (4 << 20), max(2 * est + (8 << 20), 32 << 20)))

    # ---- Grid: ragged last block instead of a jnp.pad copy of x ---------
    n_tiles = pl.cdiv(B, tm_eff)
    padded_cols = n_tiles * tm_eff

    x_spec = pl.BlockSpec((tm_eff, D), lambda i: (i, 0))
    if _padded_tile_bytes(tm_eff, D, x_elt) < (512 << 10) and n_tiles > 2:
        # Small per-step blocks: deeper pipelining keeps the DMA engine busy.
        try:
            x_spec = pl.BlockSpec((tm_eff, D), lambda i: (i, 0),
                                  pipeline_mode=pl.Buffered(3))
        except (TypeError, AttributeError):
            pass  # older API without pipeline_mode; default double-buffering

    def full(arr):
        return pl.BlockSpec(arr.shape, lambda i: (0,) * arr.ndim)

    out_row = pl.pallas_call(
        _mlp_kernel,
        out_shape=jax.ShapeDtypeStruct((1, padded_cols), jnp.float32),
        grid_spec=pltpu.PrefetchScalarGridSpec(
            num_scalar_prefetch=0,
            grid=(n_tiles,),
            in_specs=[
                x_spec,
                full(w1t), full(b1t),
                full(w2t), full(b2t),
                full(w3t), full(b3t),
                full(w4t), full(b4t),
            ],
            out_specs=pl.BlockSpec((1, tm_eff), lambda i: (0, i)),
        ),
        compiler_params=pltpu.CompilerParams(
            dimension_semantics=("parallel",),
            vmem_limit_bytes=vmem_limit),
    )(x_in, w1t, b1t, w2t, b2t, w3t, b3t, w4t, b4t)

    # (1, padded_cols) lane-dense row -> (B, 1); padded columns (derived from
    # the ragged last block's unspecified rows) are dropped here.
    return out_row[0, :B][:, None]


def init_params(key, input_dim):
    """Deterministic init mimicking PyTorch Linear default U(-1/sqrt(in), +)."""
    dims = [(input_dim, _H1), (_H1, _H2), (_H2, _H3), (_H3, _H4)]
    params = {}
    for idx, (fan_in, fan_out) in enumerate(dims, start=1):
        key, kw, kb = jax.random.split(key, 3)
        bound = 1.0 / jnp.sqrt(jnp.float32(fan_in))
        params[f"w{idx}"] = jax.random.uniform(
            kw, (fan_in, fan_out), jnp.float32, minval=-bound, maxval=bound)
        params[f"b{idx}"] = jax.random.uniform(
            kb, (1, fan_out), jnp.float32, minval=-bound, maxval=bound)
    return params


def reference_forward(x, params):
    h = jnp.maximum(x @ params["w1"] + params["b1"], 0.0)
    h = jnp.maximum(h @ params["w2"] + params["b2"], 0.0)
    h = jnp.maximum(h @ params["w3"] + params["b3"], 0.0)
    return h @ params["w4"] + params["b4"]


if __name__ == "__main__":
    key = jax.random.PRNGKey(0)

    # Small example consistent with the module.
    batch, input_dim = 8, 32
    key, kx, kp = jax.random.split(key, 3)
    x = jax.random.normal(kx, (batch, input_dim), jnp.float32)
    params = init_params(kp, input_dim)

    out = jax.block_until_ready(feedforward_nn(x, params))
    ref = reference_forward(x, params)
    assert out.shape == (batch, 1), out.shape
    assert jnp.allclose(out, ref, atol=1e-5, rtol=1e-5), "mismatch vs reference"

    # Multi-tile grid + ragged last block (no pad copy of x, B % tm != 0).
    key, kx2 = jax.random.split(key)
    x2 = jax.random.normal(kx2, (300, input_dim), jnp.float32)
    out2 = jax.block_until_ready(feedforward_nn(x2, params, tm=128))
    ref2 = reference_forward(x2, params)
    assert out2.shape == (300, 1), out2.shape
    assert jnp.allclose(out2, ref2, atol=1e-5, rtol=1e-5), "mismatch (tiled/ragged)"

    # Optional bf16 streaming path (looser tolerance).
    out3 = jax.block_until_ready(feedforward_nn(x2, params, tm=128, use_bf16=True))
    assert out3.shape == (300, 1), out3.shape
    assert jnp.allclose(out3, ref2, atol=5e-2, rtol=5e-2), "mismatch (bf16)"

    print("KERNEL_OK")
</pallas_src>

<mosaic_0001>
module attributes {stable_mosaic.version = 11 : i64} {
  func.func @_mlp_kernel(%arg0: i32, %arg1: memref<128x32xf32, #tpu.memory_space<vmem>>, %arg2: memref<64x32xf32, #tpu.memory_space<vmem>>, %arg3: memref<64x1xf32, #tpu.memory_space<vmem>>, %arg4: memref<32x64xf32, #tpu.memory_space<vmem>>, %arg5: memref<32x1xf32, #tpu.memory_space<vmem>>, %arg6: memref<16x32xf32, #tpu.memory_space<vmem>>, %arg7: memref<16x1xf32, #tpu.memory_space<vmem>>, %arg8: memref<1x16xf32, #tpu.memory_space<vmem>>, %arg9: memref<1x1xf32, #tpu.memory_space<vmem>>, %arg10: memref<1x128xf32, #tpu.memory_space<vmem>>) attributes {dimension_semantics = [#tpu.dimension_semantics<parallel>], iteration_bounds = array<i64: 1>, scalar_prefetch = 0 : i64, scratch_operands = 0 : i64, tpu.core_type = #tpu.core_type<tc>, window_params = [{transform_indices = @transform_0, window_bounds = array<i64: 128, 32>}, {pipeline_mode = #tpu.pipeline_mode<synchronous>, transform_indices = @transform_1, window_bounds = array<i64: 64, 32>}, {pipeline_mode = #tpu.pipeline_mode<synchronous>, transform_indices = @transform_2, window_bounds = array<i64: 64, 1>}, {pipeline_mode = #tpu.pipeline_mode<synchronous>, transform_indices = @transform_3, window_bounds = array<i64: 32, 64>}, {pipeline_mode = #tpu.pipeline_mode<synchronous>, transform_indices = @transform_4, window_bounds = array<i64: 32, 1>}, {pipeline_mode = #tpu.pipeline_mode<synchronous>, transform_indices = @transform_5, window_bounds = array<i64: 16, 32>}, {pipeline_mode = #tpu.pipeline_mode<synchronous>, transform_indices = @transform_6, window_bounds = array<i64: 16, 1>}, {pipeline_mode = #tpu.pipeline_mode<synchronous>, transform_indices = @transform_7, window_bounds = array<i64: 1, 16>}, {pipeline_mode = #tpu.pipeline_mode<synchronous>, transform_indices = @transform_8, window_bounds = array<i64: 1, 1>}, {transform_indices = @transform_9, window_bounds = array<i64: 1, 128>}]} {
    %c0 = arith.constant 0 : index
    %c0_0 = arith.constant 0 : index
    %0 = vector.load %arg1[%c0, %c0_0] : memref<128x32xf32, #tpu.memory_space<vmem>>, vector<128x32xf32>
    %c0_1 = arith.constant 0 : index
    %c0_2 = arith.constant 0 : index
    %1 = vector.load %arg2[%c0_1, %c0_2] : memref<64x32xf32, #tpu.memory_space<vmem>>, vector<64x32xf32>
    %cst = arith.constant dense<0.000000e+00> : vector<64x128xf32>
    %2 = tpu.matmul %1, %0, %cst {dimension_numbers = #tpu.dot_dimension_numbers<[1], [1], [0], [0], [0, 0, 1, 0], [], []>} : vector<64x32xf32>, vector<128x32xf32>, vector<64x128xf32> -> vector<64x128xf32>
    %c0_3 = arith.constant 0 : index
    %c0_4 = arith.constant 0 : index
    %3 = vector.load %arg3[%c0_3, %c0_4] : memref<64x1xf32, #tpu.memory_space<vmem>>, vector<64x1xf32>
    %4 = vector.broadcast %3 : vector<64x1xf32> to vector<64x128xf32>
    %5 = arith.addf %2, %4 : vector<64x128xf32>
    %cst_5 = arith.constant 0.000000e+00 : f32
    %6 = vector.broadcast %cst_5 : f32 to vector<64x128xf32>
    %7 = arith.maximumf %5, %6 : vector<64x128xf32>
    %c0_6 = arith.constant 0 : index
    %c0_7 = arith.constant 0 : index
    %8 = vector.load %arg4[%c0_6, %c0_7] : memref<32x64xf32, #tpu.memory_space<vmem>>, vector<32x64xf32>
    %cst_8 = arith.constant dense<0.000000e+00> : vector<32x128xf32>
    %9 = tpu.matmul %8, %7, %cst_8 {dimension_numbers = #tpu.dot_dimension_numbers<[1], [0], [0], [1], [0, 0, 1, 1], [], []>} : vector<32x64xf32>, vector<64x128xf32>, vector<32x128xf32> -> vector<32x128xf32>
    %c0_9 = arith.constant 0 : index
    %c0_10 = arith.constant 0 : index
    %10 = vector.load %arg5[%c0_9, %c0_10] : memref<32x1xf32, #tpu.memory_space<vmem>>, vector<32x1xf32>
    %11 = vector.broadcast %10 : vector<32x1xf32> to vector<32x128xf32>
    %12 = arith.addf %9, %11 : vector<32x128xf32>
    %cst_11 = arith.constant 0.000000e+00 : f32
    %13 = vector.broadcast %cst_11 : f32 to vector<32x128xf32>
    %14 = arith.maximumf %12, %13 : vector<32x128xf32>
    %c0_12 = arith.constant 0 : index
    %c0_13 = arith.constant 0 : index
    %15 = vector.load %arg6[%c0_12, %c0_13] : memref<16x32xf32, #tpu.memory_space<vmem>>, vector<16x32xf32>
    %cst_14 = arith.constant dense<0.000000e+00> : vector<16x128xf32>
    %16 = tpu.matmul %15, %14, %cst_14 {dimension_numbers = #tpu.dot_dimension_numbers<[1], [0], [0], [1], [0, 0, 1, 1], [], []>} : vector<16x32xf32>, vector<32x128xf32>, vector<16x128xf32> -> vector<16x128xf32>
    %c0_15 = arith.constant 0 : index
    %c0_16 = arith.constant 0 : index
    %17 = vector.load %arg7[%c0_15, %c0_16] : memref<16x1xf32, #tpu.memory_space<vmem>>, vector<16x1xf32>
    %18 = vector.broadcast %17 : vector<16x1xf32> to vector<16x128xf32>
    %19 = arith.addf %16, %18 : vector<16x128xf32>
    %cst_17 = arith.constant 0.000000e+00 : f32
    %20 = vector.broadcast %cst_17 : f32 to vector<16x128xf32>
    %21 = arith.maximumf %19, %20 : vector<16x128xf32>
    %c0_18 = arith.constant 0 : index
    %c0_19 = arith.constant 0 : index
    %22 = vector.load %arg8[%c0_18, %c0_19] : memref<1x16xf32, #tpu.memory_space<vmem>>, vector<1x16xf32>
    %cst_20 = arith.constant dense<0.000000e+00> : vector<1x128xf32>
    %23 = tpu.matmul %22, %21, %cst_20 {dimension_numbers = #tpu.dot_dimension_numbers<[1], [0], [0], [1], [0, 0, 1, 1], [], []>} : vector<1x16xf32>, vector<16x128xf32>, vector<1x128xf32> -> vector<1x128xf32>
    %c0_21 = arith.constant 0 : index
    %c0_22 = arith.constant 0 : index
    %24 = vector.load %arg9[%c0_21, %c0_22] : memref<1x1xf32, #tpu.memory_space<vmem>>, vector<1x1xf32>
    %25 = vector.broadcast %24 : vector<1x1xf32> to vector<1x128xf32>
    %26 = arith.addf %23, %25 : vector<1x128xf32>
    %c0_23 = arith.constant 0 : index
    %c0_24 = arith.constant 0 : index
    %27 = vector.load %arg10[%c0_23, %c0_24] : memref<1x128xf32, #tpu.memory_space<vmem>>, vector<1x128xf32>
    tpu.vector_store %arg10[%c0_23, %c0_24], %26 {strides = array<i32>} : memref<1x128xf32, #tpu.memory_space<vmem>>, vector<1x128xf32>,
    return
  }
  func.func @transform_0(%arg0: i32) -> (i32, i32) {
    %c0_i32 = arith.constant 0 : i32
    %c0_i32_0 = arith.constant 0 : i32
    return %arg0, %c0_i32 : i32, i32
  }
  func.func @transform_1(%arg0: i32) -> (i32, i32) {
    %c0_i32 = arith.constant 0 : i32
    %c0_i32_0 = arith.constant 0 : i32
    %c0_i32_1 = arith.constant 0 : i32
    return %c0_i32, %c0_i32_0 : i32, i32
  }
  func.func @transform_2(%arg0: i32) -> (i32, i32) {
    %c0_i32 = arith.constant 0 : i32
    %c0_i32_0 = arith.constant 0 : i32
    %c0_i32_1 = arith.constant 0 : i32
    return %c0_i32, %c0_i32_0 : i32, i32
  }
  func.func @transform_3(%arg0: i32) -> (i32, i32) {
    %c0_i32 = arith.constant 0 : i32
    %c0_i32_0 = arith.constant 0 : i32
    %c0_i32_1 = arith.constant 0 : i32
    return %c0_i32, %c0_i32_0 : i32, i32
  }
  func.func @transform_4(%arg0: i32) -> (i32, i32) {
    %c0_i32 = arith.constant 0 : i32
    %c0_i32_0 = arith.constant 0 : i32
    %c0_i32_1 = arith.constant 0 : i32
    return %c0_i32, %c0_i32_0 : i32, i32
  }
  func.func @transform_5(%arg0: i32) -> (i32, i32) {
    %c0_i32 = arith.constant 0 : i32
    %c0_i32_0 = arith.constant 0 : i32
    %c0_i32_1 = arith.constant 0 : i32
    return %c0_i32, %c0_i32_0 : i32, i32
  }
  func.func @transform_6(%arg0: i32) -> (i32, i32) {
    %c0_i32 = arith.constant 0 : i32
    %c0_i32_0 = arith.constant 0 : i32
    %c0_i32_1 = arith.constant 0 : i32
    return %c0_i32, %c0_i32_0 : i32, i32
  }
  func.func @transform_7(%arg0: i32) -> (i32, i32) {
    %c0_i32 = arith.constant 0 : i32
    %c0_i32_0 = arith.constant 0 : i32
    %c0_i32_1 = arith.constant 0 : i32
    return %c0_i32, %c0_i32_0 : i32, i32
  }
  func.func @transform_8(%arg0: i32) -> (i32, i32) {
    %c0_i32 = arith.constant 0 : i32
    %c0_i32_0 = arith.constant 0 : i32
    %c0_i32_1 = arith.constant 0 : i32
    return %c0_i32, %c0_i32_0 : i32, i32
  }
  func.func @transform_9(%arg0: i32) -> (i32, i32) {
    %c0_i32 = arith.constant 0 : i32
    %c0_i32_0 = arith.constant 0 : i32
    return %c0_i32, %arg0 : i32, i32
  }
}

</mosaic_0001>

<llo_original>
// kernel: feedforward_nn.1
$region0: #{feedforward_nn.1}
  #allocation0 [shape = 'u32[]', space=smem, size = 0x4, offset = 0x4, fixed_abs, tag = 'smem constant byte address 0x4 - core index']
  #allocation1 [shape = 'u32[144,128]{1,0:T(1,128)}', space=vmem, size = 0x12000, scoped, tag = 'internal scratch']
  #allocation2 [shape = 'f32[1,1]{1,0:T(1,128)S(1)}', space=vmem, size = 0x200, scoped, tag = 'scoped memory for feedforward_nn.1']
  %s0 = inlined_call_operand.vmem [shape: f32[8,32], index: 0, kind: input, shape index: {}]
  %s1 = inlined_call_operand.vmem [shape: f32[64,32], index: 1, kind: input, shape index: {}]
  %s2 = inlined_call_operand.vmem [shape: f32[64,1], index: 2, kind: input, shape index: {}]
  %s3 = inlined_call_operand.vmem [shape: f32[32,64], index: 3, kind: input, shape index: {}]
  %s4 = inlined_call_operand.vmem [shape: f32[32,1], index: 4, kind: input, shape index: {}]
  %s5 = inlined_call_operand.vmem [shape: f32[16,32], index: 5, kind: input, shape index: {}]
  %s6 = inlined_call_operand.vmem [shape: f32[16,1], index: 6, kind: input, shape index: {}]
  %s7 = inlined_call_operand.vmem [shape: f32[1,16], index: 7, kind: input, shape index: {}]
  %s8 = inlined_call_operand.<no memory space> [shape: f32[1,1], index: 8, kind: input, shape index: {}]
  %s9 = inlined_call_operand.vmem [shape: f32[1,128], index: 9, kind: output, shape index: {}]
  %s10 = sld [smem:[#allocation0]]
  $region46: #{feedforward_nn.1} parent=0
    _
  %s12 = ssub.s32 1, %s10
  %s13 = scalar_select 0, %s12, %s10
  %v14 = vstv %s8
  %15 = vst [vmem:[#allocation2] sm:$0x1] %v14
  // Predicated region
  $region2: #{feedforward_nn.1} parent=0 // pred_check
    _
  $region3: #{feedforward_nn.1} parent=0 // pred_check_branch
    %17 = sbr.rel (0) target = $region5
  $region4: #{feedforward_nn.1} parent=0 // pred_region
    _
  $region5: #{feedforward_nn.1} parent=0 // pred_fallthru
    _
  // Predicated region
  $region6: #{feedforward_nn.1} parent=0 // pred_check
    _
  $region7: #{feedforward_nn.1} parent=0 // pred_check_branch
    %19 = sbr.rel (0) target = $region9
  $region8: #{feedforward_nn.1} parent=0 // pred_region
    _
  $region9: #{feedforward_nn.1} parent=0 // pred_fallthru
    _
  // Predicated region
  $region10: #{feedforward_nn.1} parent=0 // pred_check
    _
  $region11: #{feedforward_nn.1} parent=0 // pred_check_branch
    %21 = sbr.rel (0) target = $region13
  $region12: #{feedforward_nn.1} parent=0 // pred_region
    _
  $region13: #{feedforward_nn.1} parent=0 // pred_fallthru
    _
  // Predicated region
  $region14: #{feedforward_nn.1} parent=0 // pred_check
    _
  $region15: #{feedforward_nn.1} parent=0 // pred_check_branch
    %23 = sbr.rel (0) target = $region17
  $region16: #{feedforward_nn.1} parent=0 // pred_region
    _
  $region17: #{feedforward_nn.1} parent=0 // pred_fallthru
    _
  // Predicated region
  $region18: #{feedforward_nn.1} parent=0 // pred_check
    _
  $region19: #{feedforward_nn.1} parent=0 // pred_check_branch
    %25 = sbr.rel (0) target = $region21
  $region20: #{feedforward_nn.1} parent=0 // pred_region
    _
  $region21: #{feedforward_nn.1} parent=0 // pred_fallthru
    _
  // Predicated region
  $region22: #{feedforward_nn.1} parent=0 // pred_check
    _
  $region23: #{feedforward_nn.1} parent=0 // pred_check_branch
    %27 = sbr.rel (0) target = $region25
  $region24: #{feedforward_nn.1} parent=0 // pred_region
    _
  $region25: #{feedforward_nn.1} parent=0 // pred_fallthru
    _
  // Predicated region
  $region26: #{feedforward_nn.1} parent=0 // pred_check
    _
  $region27: #{feedforward_nn.1} parent=0 // pred_check_branch
    %29 = sbr.rel (0) target = $region29
  $region28: #{feedforward_nn.1} parent=0 // pred_region
    _
  $region29: #{feedforward_nn.1} parent=0 // pred_fallthru
    _
  // Predicated region
  $region30: #{feedforward_nn.1} parent=0 // pred_check
    _
  $region31: #{feedforward_nn.1} parent=0 // pred_check_branch
    %31 = sbr.rel (0) target = $region33
  $region32: #{feedforward_nn.1} parent=0 // pred_region
    _
  $region33: #{feedforward_nn.1} parent=0 // pred_fallthru
    _
  // Predicated region
  $region34: #{feedforward_nn.1} parent=0 // pred_check
    _
  $region35: #{feedforward_nn.1} parent=0 // pred_check_branch
    %33 = sbr.rel (0) target = $region37
  $region36: #{feedforward_nn.1} parent=0 // pred_region
    _
  $region37: #{feedforward_nn.1} parent=0 // pred_fallthru
    _
  %v34 = vld [vmem:[%s0] sm:$0xff]
  %v35 = vld [vmem:[%s0 + $0x8] sm:$0xff]
  %v36 = vld [vmem:[%s0 + $0x10] sm:$0xff]
  %v37 = vld [vmem:[%s0 + $0x18] sm:$0xff]
  %v38 = vld [vmem:[%s0 + $0x20] sm:$0xff]
  %v39 = vld [vmem:[%s0 + $0x28] sm:$0xff]
  %v40 = vld [vmem:[%s0 + $0x30] sm:$0xff]
  %v41 = vld [vmem:[%s0 + $0x38] sm:$0xff]
  %v42 = vld [vmem:[%s0 + $0x40] sm:$0xff]
  %v43 = vld [vmem:[%s0 + $0x48] sm:$0xff]
  %v44 = vld [vmem:[%s0 + $0x50] sm:$0xff]
  %v45 = vld [vmem:[%s0 + $0x58] sm:$0xff]
  %v46 = vld [vmem:[%s0 + $0x60] sm:$0xff]
  %v47 = vld [vmem:[%s0 + $0x68] sm:$0xff]
  %v48 = vld [vmem:[%s0 + $0x70] sm:$0xff]
  %v49 = vld [vmem:[%s0 + $0x78] sm:$0xff]
  %v50 = vld [vmem:[%s1] sm:$0xff]
  %v51 = vld [vmem:[%s1 + $0x8] sm:$0xff]
  %v52 = vld [vmem:[%s1 + $0x10] sm:$0xff]
  %v53 = vld [vmem:[%s1 + $0x18] sm:$0xff]
  %v54 = vld [vmem:[%s1 + $0x20] sm:$0xff]
  %v55 = vld [vmem:[%s1 + $0x28] sm:$0xff]
  %v56 = vld [vmem:[%s1 + $0x30] sm:$0xff]
  %v57 = vld [vmem:[%s1 + $0x38] sm:$0xff]
  %v58 = vld [vmem:[%s2] sm:$0xff]
  %v59 = vld [vmem:[%s2 + $0x8] sm:$0xff]
  %v60 = vld [vmem:[%s2 + $0x10] sm:$0xff]
  %v61 = vld [vmem:[%s2 + $0x18] sm:$0xff]
  %v62 = vld [vmem:[%s2 + $0x20] sm:$0xff]
  %v63 = vld [vmem:[%s2 + $0x28] sm:$0xff]
  %v64 = vld [vmem:[%s2 + $0x30] sm:$0xff]
  %v65 = vld [vmem:[%s2 + $0x38] sm:$0xff]
  %67 = vset.pattern.permute.xlu0 0
  %68 = vperm.xlu0 %67, %v58
  %v69 = vpop.permute.xlu0 %68
  %72 = vset.pattern.permute.xlu0 0
  %73 = vperm.xlu0 %72, %v59
  %v74 = vpop.permute.xlu0 %73
  %77 = vset.pattern.permute.xlu0 0
  %78 = vperm.xlu0 %77, %v60
  %v79 = vpop.permute.xlu0 %78
  %82 = vset.pattern.permute.xlu0 0
  %83 = vperm.xlu0 %82, %v61
  %v84 = vpop.permute.xlu0 %83
  %87 = vset.pattern.permute.xlu0 0
  %88 = vperm.xlu0 %87, %v62
  %v89 = vpop.permute.xlu0 %88
  %92 = vset.pattern.permute.xlu0 0
  %93 = vperm.xlu0 %92, %v63
  %v94 = vpop.permute.xlu0 %93
  %97 = vset.pattern.permute.xlu0 0
  %98 = vperm.xlu0 %97, %v64
  %v99 = vpop.permute.xlu0 %98
  %102 = vset.pattern.permute.xlu0 0
  %103 = vperm.xlu0 %102, %v65
  %v104 = vpop.permute.xlu0 %103
  %vm106 = vcmask 261120
  %v108 = vsel %vm106, %v50, 0
  %v111 = vsel %vm106, %v51, 0
  %v114 = vsel %vm106, %v52, 0
  %v117 = vsel %vm106, %v53, 0
  %v120 = vsel %vm106, %v54, 0
  %v123 = vsel %vm106, %v55, 0
  %v126 = vsel %vm106, %v56, 0
  %v129 = vsel %vm106, %v57, 0
  %v132 = vsel %vm106, %v34, 0
  %v135 = vsel %vm106, %v35, 0
  %v138 = vsel %vm106, %v36, 0
  %v141 = vsel %vm106, %v37, 0
  %v144 = vsel %vm106, %v38, 0
  %v147 = vsel %vm106, %v39, 0
  %v150 = vsel %vm106, %v40, 0
  %v153 = vsel %vm106, %v41, 0
  %v156 = vsel %vm106, %v42, 0
  %v159 = vsel %vm106, %v43, 0
  %v162 = vsel %vm106, %v44, 0
  %v165 = vsel %vm106, %v45, 0
  %v168 = vsel %vm106, %v46, 0
  %v171 = vsel %vm106, %v47, 0
  %v174 = vsel %vm106, %v48, 0
  %v177 = vsel %vm106, %v49, 0
  %179 = vmatprep.subr.mxu0 0.0
  %180 = vmatpush1.xpose.msra.mxu0 %v132
  %181 = vmatprep.subr.mxu0 0.0
  %182 = vmatpush1.xpose.msra.mxu0 %v135
  %183 = vmatprep.subr.mxu0 0.0
  %184 = vmatpush1.xpose.msra.mxu0 %v138
  %185 = vmatprep.subr.mxu0 0.0
  %186 = vmatpush1.xpose.msra.mxu0 %v141
  %187 = vmatprep.subr.mxu0 0.0
  %188 = vmatpush1.xpose.msra.mxu0 %v144
  %189 = vmatprep.subr.mxu0 0.0
  %190 = vmatpush1.xpose.msra.mxu0 %v147
  %191 = vmatprep.subr.mxu0 0.0
  %192 = vmatpush1.xpose.msra.mxu0 %v150
  %193 = vmatprep.subr.mxu0 0.0
  %194 = vmatpush1.xpose.msra.mxu0 %v153
  %195 = vmatprep.subr.mxu0 0.0
  %196 = vmatpush1.xpose.msra.mxu0 %v156
  %197 = vmatprep.subr.mxu0 0.0
  %198 = vmatpush1.xpose.msra.mxu0 %v159
  %199 = vmatprep.subr.mxu0 0.0
  %200 = vmatpush1.xpose.msra.mxu0 %v162
  %201 = vmatprep.subr.mxu0 0.0
  %202 = vmatpush1.xpose.msra.mxu0 %v165
  %203 = vmatprep.subr.mxu0 0.0
  %204 = vmatpush1.xpose.msra.mxu0 %v168
  %205 = vmatprep.subr.mxu0 0.0
  %206 = vmatpush1.xpose.msra.mxu0 %v171
  %207 = vmatprep.subr.mxu0 0.0
  %208 = vmatpush1.xpose.msra.mxu0 %v174
  %209 = vmatprep.subr.mxu0 0.0
  %210 = vmatpush1.xpose.msra.mxu0 %v177
  %211 = vmatprep.subr.mxu0 0.0
  %212 = vmatpush1.xpose.msra.mxu0 0.0
  %213 = vmatprep.subr.mxu0 0.0
  %214 = vmatpush1.xpose.msra.mxu0 0.0
  %215 = vmatprep.subr.mxu0 0.0
  %216 = vmatpush1.xpose.msra.mxu0 0.0
  %217 = vmatprep.subr.mxu0 0.0
  %218 = vmatpush1.xpose.msra.mxu0 0.0
  %219 = vmatprep.subr.mxu0 0.0
  %220 = vmatpush1.xpose.msra.mxu0 0.0
  %221 = vmatprep.subr.mxu0 0.0
  %222 = vmatpush1.xpose.msra.mxu0 0.0
  %223 = vmatprep.subr.mxu0 0.0
  %224 = vmatpush1.xpose.msra.mxu0 0.0
  %225 = vmatprep.subr.mxu0 0.0
  %226 = vmatpush1.xpose.msra.mxu0 0.0
  %227 = vmatprep.subr.mxu0 0.0
  %228 = vmatpush1.xpose.msra.mxu0 0.0
  %229 = vmatprep.subr.mxu0 0.0
  %230 = vmatpush1.xpose.msra.mxu0 0.0
  %231 = vmatprep.subr.mxu0 0.0
  %232 = vmatpush1.xpose.msra.mxu0 0.0
  %233 = vmatprep.subr.mxu0 0.0
  %234 = vmatpush1.xpose.msra.mxu0 0.0
  %235 = vmatprep.subr.mxu0 0.0
  %236 = vmatpush1.xpose.msra.mxu0 0.0
  %237 = vmatprep.subr.mxu0 0.0
  %238 = vmatpush1.xpose.msra.mxu0 0.0
  %239 = vmatprep.subr.mxu0 0.0
  %240 = vmatpush1.xpose.msra.mxu0 0.0
  %241 = vmatprep.subr.mxu0 0.0
  %242 = vmatpush1.xpose.msra.mxu0 0.0
  %243 = vmatprep.mubr.f32.mxu0 0.0
  %244 = vmatmul.mubr.f32.gmra.mrb[0].mxu0 %v108
  %v245 = vpop.f32.mrb[0].mxu0
  %v246 = vadd.f32 %v69, %v245
  %v247 = vpop.f32.mrb[0].mxu0
  %248 = vmatprep.mubr.f32.mxu0 0.0
  %249 = vmatmul.mubr.f32.gmra.mrb[0].mxu0 %v111
  %v250 = vpop.f32.mrb[0].mxu0
  %v251 = vadd.f32 %v74, %v250
  %v252 = vpop.f32.mrb[0].mxu0
  %253 = vmatprep.mubr.f32.mxu0 0.0
  %254 = vmatmul.mubr.f32.gmra.mrb[0].mxu0 %v114
  %v255 = vpop.f32.mrb[0].mxu0
  %v256 = vadd.f32 %v79, %v255
  %v257 = vpop.f32.mrb[0].mxu0
  %258 = vmatprep.mubr.f32.mxu0 0.0
  %259 = vmatmul.mubr.f32.gmra.mrb[0].mxu0 %v117
  %v260 = vpop.f32.mrb[0].mxu0
  %v261 = vadd.f32 %v84, %v260
  %v262 = vpop.f32.mrb[0].mxu0
  %263 = vmatprep.mubr.f32.mxu0 0.0
  %264 = vmatmul.mubr.f32.gmra.mrb[0].mxu0 %v120
  %v265 = vpop.f32.mrb[0].mxu0
  %v266 = vadd.f32 %v89, %v265
  %v267 = vpop.f32.mrb[0].mxu0
  %268 = vmatprep.mubr.f32.mxu0 0.0
  %269 = vmatmul.mubr.f32.gmra.mrb[0].mxu0 %v123
  %v270 = vpop.f32.mrb[0].mxu0
  %v271 = vadd.f32 %v94, %v270
  %v272 = vpop.f32.mrb[0].mxu0
  %273 = vmatprep.mubr.f32.mxu0 0.0
  %274 = vmatmul.mubr.f32.gmra.mrb[0].mxu0 %v126
  %v275 = vpop.f32.mrb[0].mxu0
  %v276 = vadd.f32 %v99, %v275
  %v277 = vpop.f32.mrb[0].mxu0
  %278 = vmatprep.mubr.f32.mxu0 0.0
  %279 = vmatmul.mubr.f32.gmra.mrb[0].mxu0 %v129
  %v280 = vpop.f32.mrb[0].mxu0
  %v281 = vadd.f32 %v104, %v280
  %v282 = vpop.f32.mrb[0].mxu0
  %283 = vdwg.mxu0
  %v284 = vmax.f32 %v246, 0.0
  %v285 = vmax.f32 %v251, 0.0
  %v286 = vmax.f32 %v256, 0.0
  %v287 = vmax.f32 %v261, 0.0
  %v288 = vmax.f32 %v266, 0.0
  %v289 = vmax.f32 %v271, 0.0
  %v290 = vmax.f32 %v276, 0.0
  %v291 = vmax.f32 %v281, 0.0
  %v292 = vld [vmem:[%s3] sm:$0xff]
  %v293 = vld [vmem:[%s3 + $0x8] sm:$0xff]
  %v294 = vld [vmem:[%s3 + $0x10] sm:$0xff]
  %v295 = vld [vmem:[%s3 + $0x18] sm:$0xff]
  %v296 = vld [vmem:[%s4] sm:$0xff]
  %v297 = vld [vmem:[%s4 + $0x8] sm:$0xff]
  %v298 = vld [vmem:[%s4 + $0x10] sm:$0xff]
  %v299 = vld [vmem:[%s4 + $0x18] sm:$0xff]
  %301 = vset.pattern.permute.xlu0 0
  %302 = vperm.xlu0 %301, %v296
  %v303 = vpop.permute.xlu0 %302
  %306 = vset.pattern.permute.xlu0 0
  %307 = vperm.xlu0 %306, %v297
  %v308 = vpop.permute.xlu0 %307
  %311 = vset.pattern.permute.xlu0 0
  %312 = vperm.xlu0 %311, %v298
  %v313 = vpop.permute.xlu0 %312
  %316 = vset.pattern.permute.xlu0 0
  %317 = vperm.xlu0 %316, %v299
  %v318 = vpop.permute.xlu0 %317
  %vm320 = vcmask 523264
  %v322 = vsel %vm320, %v292, 0
  %v325 = vsel %vm320, %v293, 0
  %v328 = vsel %vm320, %v294, 0
  %v331 = vsel %vm320, %v295, 0
  %333 = vmatprep.subr.mxu0 0.0
  %334 = vmatpush1.msra.mxu0 %v284
  %335 = vmatprep.subr.mxu0 0.0
  %336 = vmatpush1.msra.mxu0 %v285
  %337 = vmatprep.subr.mxu0 0.0
  %338 = vmatpush1.msra.mxu0 %v286
  %339 = vmatprep.subr.mxu0 0.0
  %340 = vmatpush1.msra.mxu0 %v287
  %341 = vmatprep.subr.mxu0 0.0
  %342 = vmatpush1.msra.mxu0 %v288
  %343 = vmatprep.subr.mxu0 0.0
  %344 = vmatpush1.msra.mxu0 %v289
  %345 = vmatprep.subr.mxu0 0.0
  %346 = vmatpush1.msra.mxu0 %v290
  %347 = vmatprep.subr.mxu0 0.0
  %348 = vmatpush1.msra.mxu0 %v291
  %349 = vmatprep.subr.mxu0 0.0
  %350 = vmatpush1.msra.mxu0 0.0
  %351 = vmatprep.subr.mxu0 0.0
  %352 = vmatpush1.msra.mxu0 0.0
  %353 = vmatprep.subr.mxu0 0.0
  %354 = vmatpush1.msra.mxu0 0.0
  %355 = vmatprep.subr.mxu0 0.0
  %356 = vmatpush1.msra.mxu0 0.0
  %357 = vmatprep.subr.mxu0 0.0
  %358 = vmatpush1.msra.mxu0 0.0
  %359 = vmatprep.subr.mxu0 0.0
  %360 = vmatpush1.msra.mxu0 0.0
  %361 = vmatprep.subr.mxu0 0.0
  %362 = vmatpush1.msra.mxu0 0.0
  %363 = vmatprep.subr.mxu0 0.0
  %364 = vmatpush1.msra.mxu0 0.0
  %365 = vmatprep.subr.mxu0 0.0
  %366 = vmatpush1.msra.mxu0 0.0
  %367 = vmatprep.subr.mxu0 0.0
  %368 = vmatpush1.msra.mxu0 0.0
  %369 = vmatprep.subr.mxu0 0.0
  %370 = vmatpush1.msra.mxu0 0.0
  %371 = vmatprep.subr.mxu0 0.0
  %372 = vmatpush1.msra.mxu0 0.0
  %373 = vmatprep.subr.mxu0 0.0
  %374 = vmatpush1.msra.mxu0 0.0
  %375 = vmatprep.subr.mxu0 0.0
  %376 = vmatpush1.msra.mxu0 0.0
  %377 = vmatprep.subr.mxu0 0.0
  %378 = vmatpush1.msra.mxu0 0.0
  %379 = vmatprep.subr.mxu0 0.0
  %380 = vmatpush1.msra.mxu0 0.0
  %381 = vmatprep.subr.mxu0 0.0
  %382 = vmatpush1.msra.mxu0 0.0
  %383 = vmatprep.subr.mxu0 0.0
  %384 = vmatpush1.msra.mxu0 0.0
  %385 = vmatprep.subr.mxu0 0.0
  %386 = vmatpush1.msra.mxu0 0.0
  %387 = vmatprep.subr.mxu0 0.0
  %388 = vmatpush1.msra.mxu0 0.0
  %389 = vmatprep.subr.mxu0 0.0
  %390 = vmatpush1.msra.mxu0 0.0
  %391 = vmatprep.subr.mxu0 0.0
  %392 = vmatpush1.msra.mxu0 0.0
  %393 = vmatprep.subr.mxu0 0.0
  %394 = vmatpush1.msra.mxu0 0.0
  %395 = vmatprep.subr.mxu0 0.0
  %396 = vmatpush1.msra.mxu0 0.0
  %397 = vmatprep.mubr.f32.mxu0 0.0
  %398 = vmatmul.mubr.f32.gmra.mrb[0].mxu0 %v322
  %v399 = vpop.f32.mrb[0].mxu0
  %v400 = vadd.f32 %v303, %v399
  %v401 = vpop.f32.mrb[0].mxu0
  %402 = vmatprep.mubr.f32.mxu0 0.0
  %403 = vmatmul.mubr.f32.gmra.mrb[0].mxu0 %v325
  %v404 = vpop.f32.mrb[0].mxu0
  %v405 = vadd.f32 %v308, %v404
  %v406 = vpop.f32.mrb[0].mxu0
  %407 = vmatprep.mubr.f32.mxu0 0.0
  %408 = vmatmul.mubr.f32.gmra.mrb[0].mxu0 %v328
  %v409 = vpop.f32.mrb[0].mxu0
  %v410 = vadd.f32 %v313, %v409
  %v411 = vpop.f32.mrb[0].mxu0
  %412 = vmatprep.mubr.f32.mxu0 0.0
  %413 = vmatmul.mubr.f32.gmra.mrb[0].mxu0 %v331
  %v414 = vpop.f32.mrb[0].mxu0
  %v415 = vadd.f32 %v318, %v414
  %v416 = vpop.f32.mrb[0].mxu0
  %417 = vdwg.mxu0
  %v418 = vmax.f32 %v400, 0.0
  %v419 = vmax.f32 %v405, 0.0
  %v420 = vmax.f32 %v410, 0.0
  %v421 = vmax.f32 %v415, 0.0
  %v422 = vld [vmem:[%s5] sm:$0xff]
  %v423 = vld [vmem:[%s5 + $0x8] sm:$0xff]
  %v424 = vld [vmem:[%s6] sm:$0xff]
  %v425 = vld [vmem:[%s6 + $0x8] sm:$0xff]
  %427 = vset.pattern.permute.xlu0 0
  %428 = vperm.xlu0 %427, %v424
  %v429 = vpop.permute.xlu0 %428
  %432 = vset.pattern.permute.xlu0 0
  %433 = vperm.xlu0 %432, %v425
  %v434 = vpop.permute.xlu0 %433
  %v437 = vsel %vm106, %v422, 0
  %v440 = vsel %vm106, %v423, 0
  %442 = vmatprep.subr.mxu0 0.0
  %443 = vmatpush1.msra.mxu0 %v418
  %444 = vmatprep.subr.mxu0 0.0
  %445 = vmatpush1.msra.mxu0 %v419
  %446 = vmatprep.subr.mxu0 0.0
  %447 = vmatpush1.msra.mxu0 %v420
  %448 = vmatprep.subr.mxu0 0.0
  %449 = vmatpush1.msra.mxu0 %v421
  %450 = vmatprep.subr.mxu0 0.0
  %451 = vmatpush1.msra.mxu0 0.0
  %452 = vmatprep.subr.mxu0 0.0
  %453 = vmatpush1.msra.mxu0 0.0
  %454 = vmatprep.subr.mxu0 0.0
  %455 = vmatpush1.msra.mxu0 0.0
  %456 = vmatprep.subr.mxu0 0.0
  %457 = vmatpush1.msra.mxu0 0.0
  %458 = vmatprep.subr.mxu0 0.0
  %459 = vmatpush1.msra.mxu0 0.0
  %460 = vmatprep.subr.mxu0 0.0
  %461 = vmatpush1.msra.mxu0 0.0
  %462 = vmatprep.subr.mxu0 0.0
  %463 = vmatpush1.msra.mxu0 0.0
  %464 = vmatprep.subr.mxu0 0.0
  %465 = vmatpush1.msra.mxu0 0.0
  %466 = vmatprep.subr.mxu0 0.0
  %467 = vmatpush1.msra.mxu0 0.0
  %468 = vmatprep.subr.mxu0 0.0
  %469 = vmatpush1.msra.mxu0 0.0
  %470 = vmatprep.subr.mxu0 0.0
  %471 = vmatpush1.msra.mxu0 0.0
  %472 = vmatprep.subr.mxu0 0.0
  %473 = vmatpush1.msra.mxu0 0.0
  %474 = vmatprep.subr.mxu0 0.0
  %475 = vmatpush1.msra.mxu0 0.0
  %476 = vmatprep.subr.mxu0 0.0
  %477 = vmatpush1.msra.mxu0 0.0
  %478 = vmatprep.subr.mxu0 0.0
  %479 = vmatpush1.msra.mxu0 0.0
  %480 = vmatprep.subr.mxu0 0.0
  %481 = vmatpush1.msra.mxu0 0.0
  %482 = vmatprep.subr.mxu0 0.0
  %483 = vmatpush1.msra.mxu0 0.0
  %484 = vmatprep.subr.mxu0 0.0
  %485 = vmatpush1.msra.mxu0 0.0
  %486 = vmatprep.subr.mxu0 0.0
  %487 = vmatpush1.msra.mxu0 0.0
  %488 = vmatprep.subr.mxu0 0.0
  %489 = vmatpush1.msra.mxu0 0.0
  %490 = vmatprep.subr.mxu0 0.0
  %491 = vmatpush1.msra.mxu0 0.0
  %492 = vmatprep.subr.mxu0 0.0
  %493 = vmatpush1.msra.mxu0 0.0
  %494 = vmatprep.subr.mxu0 0.0
  %495 = vmatpush1.msra.mxu0 0.0
  %496 = vmatprep.subr.mxu0 0.0
  %497 = vmatpush1.msra.mxu0 0.0
  %498 = vmatprep.subr.mxu0 0.0
  %499 = vmatpush1.msra.mxu0 0.0
  %500 = vmatprep.subr.mxu0 0.0
  %501 = vmatpush1.msra.mxu0 0.0
  %502 = vmatprep.subr.mxu0 0.0
  %503 = vmatpush1.msra.mxu0 0.0
  %504 = vmatprep.subr.mxu0 0.0
  %505 = vmatpush1.msra.mxu0 0.0
  %506 = vmatprep.mubr.f32.mxu0 0.0
  %507 = vmatmul.mubr.f32.gmra.mrb[0].mxu0 %v437
  %v508 = vpop.f32.mrb[0].mxu0
  %v509 = vadd.f32 %v429, %v508
  %v510 = vpop.f32.mrb[0].mxu0
  %511 = vmatprep.mubr.f32.mxu0 0.0
  %512 = vmatmul.mubr.f32.gmra.mrb[0].mxu0 %v440
  %v513 = vpop.f32.mrb[0].mxu0
  %v514 = vadd.f32 %v434, %v513
  %v515 = vpop.f32.mrb[0].mxu0
  %516 = vdwg.mxu0
  %v517 = vmax.f32 %v509, 0.0
  %v518 = vmax.f32 %v514, 0.0
  %v519 = vld [vmem:[%s7] sm:$0x1]
  %v520 = vld [vmem:[#allocation2] sm:$0x1]
  %522 = vset.pattern.permute.xlu0 0
  %523 = vperm.xlu0 %522, %v520
  %v524 = vpop.permute.xlu0 %523
  %v526 = vlaneseq
  %v527 = vshrl.u32 %v526, 7
  %v528 = vsub.s32 0, %v527
  %v529 = vrot.slane %v524, %v528
  %vm530 = vcmask 130048
  %v532 = vsel %vm530, %v519, 0
  %534 = vmatprep.subr.mxu0 0.0
  %535 = vmatpush1.msra.mxu0 %v517
  %536 = vmatprep.subr.mxu0 0.0
  %537 = vmatpush1.msra.mxu0 %v518
  %538 = vmatprep.subr.mxu0 0.0
  %539 = vmatpush1.msra.mxu0 0.0
  %540 = vmatprep.subr.mxu0 0.0
  %541 = vmatpush1.msra.mxu0 0.0
  %542 = vmatprep.subr.mxu0 0.0
  %543 = vmatpush1.msra.mxu0 0.0
  %544 = vmatprep.subr.mxu0 0.0
  %545 = vmatpush1.msra.mxu0 0.0
  %546 = vmatprep.subr.mxu0 0.0
  %547 = vmatpush1.msra.mxu0 0.0
  %548 = vmatprep.subr.mxu0 0.0
  %549 = vmatpush1.msra.mxu0 0.0
  %550 = vmatprep.subr.mxu0 0.0
  %551 = vmatpush1.msra.mxu0 0.0
  %552 = vmatprep.subr.mxu0 0.0
  %553 = vmatpush1.msra.mxu0 0.0
  %554 = vmatprep.subr.mxu0 0.0
  %555 = vmatpush1.msra.mxu0 0.0
  %556 = vmatprep.subr.mxu0 0.0
  %557 = vmatpush1.msra.mxu0 0.0
  %558 = vmatprep.subr.mxu0 0.0
  %559 = vmatpush1.msra.mxu0 0.0
  %560 = vmatprep.subr.mxu0 0.0
  %561 = vmatpush1.msra.mxu0 0.0
  %562 = vmatprep.subr.mxu0 0.0
  %563 = vmatpush1.msra.mxu0 0.0
  %564 = vmatprep.subr.mxu0 0.0
  %565 = vmatpush1.msra.mxu0 0.0
  %566 = vmatprep.subr.mxu0 0.0
  %567 = vmatpush1.msra.mxu0 0.0
  %568 = vmatprep.subr.mxu0 0.0
  %569 = vmatpush1.msra.mxu0 0.0
  %570 = vmatprep.subr.mxu0 0.0
  %571 = vmatpush1.msra.mxu0 0.0
  %572 = vmatprep.subr.mxu0 0.0
  %573 = vmatpush1.msra.mxu0 0.0
  %574 = vmatprep.subr.mxu0 0.0
  %575 = vmatpush1.msra.mxu0 0.0
  %576 = vmatprep.subr.mxu0 0.0
  %577 = vmatpush1.msra.mxu0 0.0
  %578 = vmatprep.subr.mxu0 0.0
  %579 = vmatpush1.msra.mxu0 0.0
  %580 = vmatprep.subr.mxu0 0.0
  %581 = vmatpush1.msra.mxu0 0.0
  %582 = vmatprep.subr.mxu0 0.0
  %583 = vmatpush1.msra.mxu0 0.0
  %584 = vmatprep.subr.mxu0 0.0
  %585 = vmatpush1.msra.mxu0 0.0
  %586 = vmatprep.subr.mxu0 0.0
  %587 = vmatpush1.msra.mxu0 0.0
  %588 = vmatprep.subr.mxu0 0.0
  %589 = vmatpush1.msra.mxu0 0.0
  %590 = vmatprep.subr.mxu0 0.0
  %591 = vmatpush1.msra.mxu0 0.0
  %592 = vmatprep.subr.mxu0 0.0
  %593 = vmatpush1.msra.mxu0 0.0
  %594 = vmatprep.subr.mxu0 0.0
  %595 = vmatpush1.msra.mxu0 0.0
  %596 = vmatprep.subr.mxu0 0.0
  %597 = vmatpush1.msra.mxu0 0.0
  %598 = vmatprep.mubr.f32.mxu0 0.0
  %599 = vmatmul.mubr.f32.gmra.mrb[0].mxu0 %v532
  %v600 = vpop.f32.mrb[0].mxu0
  %v601 = vadd.f32 %v529, %v600
  %v602 = vpop.f32.mrb[0].mxu0
  %603 = vdwg.mxu0
  %604 = vst [vmem:[%s9] sm:$0x1] %v601
  // Predicated region
  $region38: #{feedforward_nn.1} parent=0 // pred_check
    _
  $region39: #{feedforward_nn.1} parent=0 // pred_check_branch
    %606 = sbr.rel (0) target = $region41
  $region40: #{feedforward_nn.1} parent=0 // pred_region
    _
  $region41: #{feedforward_nn.1} parent=0 // pred_fallthru
    _
  // Predicated region
  $region42: #{feedforward_nn.1} parent=0 // pred_check
    _
  $region43: #{feedforward_nn.1} parent=0 // pred_check_branch
    %608 = sbr.rel (0) target = $region45
  $region44: #{feedforward_nn.1} parent=0 // pred_region
    _
  $region45: #{feedforward_nn.1} parent=0 // pred_fallthru
    _

</llo_original>
